<compile_context>
chip_gen: v7x
topology: tpu7x:2x2x1
jax: 0.10.0
libtpu: 0.0.40
codegen_flags: <defaults>
</compile_context>

<pallas_src>
import math
import functools

import jax
import jax.numpy as jnp
from jax import lax
from jax.experimental import pallas as pl
from jax.experimental.pallas import tpu as pltpu


def _attn_kernel(x_ref, consts_ref, shift_ref, out_ref, ld_ref, *, valid_limit):
    # x_ref:      (TB, C, TS, 128)   spatial repacked as (rows, 128 lanes)
    # consts_ref: (3, C, 128)        [0] w_mean[c]*mask[c,lane]
    #                                [1] (sigmoid(s[c])+1e-6)*mask[c,lane]
    #                                [2] 1 - mask[c,lane]
    # shift_ref:  (1, 1) SMEM        mean(bias) + offset
    # out_ref:    (TB, C, TS, 128)
    # ld_ref:     (TB, 1, 1, 128)    per-(batch-block, spatial-tile) logdet partials
    # valid_limit: python int (real L) when the spatial axis was zero-padded, else None
    x = x_ref[...].astype(jnp.float32)                    # (TB, C, TS, 128)
    wmask = consts_ref[0]                                  # (C, 128)
    s_masked = consts_ref[1]                               # (C, 128)
    inv_mask = consts_ref[2]                               # (C, 128)
    shift = shift_ref[0, 0]

    TB, C, TS, LN = x.shape

    # pool[b, r, lane] = sum_c (x * mask)[b, c, r, lane] * w_mean[c]
    # (mask is folded into wmask; C-1 VALU adds, no XLU sublane reduce)
    pool = x[:, 0] * wmask[0][None, None, :]
    for c in range(1, C):
        pool = pool + x[:, c] * wmask[c][None, None, :]
    attn = jax.nn.sigmoid(pool + shift) + 1e-6             # (TB, TS, 128)

    # attn_mask = mask * (sigmoid(s)+1e-6) + (1 - mask) * attn
    attn_mask = (s_masked[None, :, None, :]
                 + inv_mask[None, :, None, :] * attn[:, None, :, :])
    out_ref[...] = (x * attn_mask).astype(out_ref.dtype)

    # per-tile, per-batch logdet partial: (C//2) * sum_l log(attn[l])
    logs = jnp.log(attn)                                    # (TB, TS, 128)
    if valid_limit is not None:
        row = lax.broadcasted_iota(jnp.int32, (TS, LN), 0)
        lane = lax.broadcasted_iota(jnp.int32, (TS, LN), 1)
        gpos = (pl.program_id(1) * TS + row) * LN + lane
        logs = jnp.where((gpos < valid_limit)[None], logs, 0.0)
    ld = jnp.float32(C // 2) * jnp.sum(logs, axis=(1, 2))   # (TB,)
    ld_ref[...] = jnp.broadcast_to(ld.reshape(TB, 1, 1, 1), ld_ref.shape)


def _round_up(a, m):
    return -(-a // m) * m


def _choose_tiles(B, C, NR0):
    """Pick (TB, TS, NR_padded): batch-block, row-block and padded row count.

    Targets ~4 MiB of combined in+out f32 payload per grid step (amortizes the
    ~0.35us per-step pipeline overhead), keeps the double-buffered blocks well
    under the explicit 32 MiB scoped-VMEM limit (valid on v5e/v6e/v7x), and
    keeps the grid >= 2 steps when possible so both v7x TensorCores get work.
    Sublane padding is inherent: TS is always a multiple of 8.
    """
    NR_al = _round_up(max(NR0, 1), 8)
    # rows per step so that 2 * C * rows * 128 * 4 bytes ~= 4 MiB
    target_rows = max(8, ((4 * 1024 * 1024) // (2 * C * 128 * 4) // 8) * 8)

    if NR_al <= target_rows:
        TS = NR_al
        NR = NR_al
        # whole (padded) spatial extent fits in one block: also block batches
        tb_cap = max(1, target_rows // NR_al)
        TB = 1
        for d in range(1, B + 1):
            if B % d == 0 and d <= tb_cap:
                TB = d
    else:
        # look for a multiple-of-8 divisor of NR_al near the target row count
        TS = None
        lo = max(8, (target_rows // 2 // 8) * 8)
        for cand in range(target_rows, lo - 1, -8):
            if NR_al % cand == 0:
                TS = cand
                break
        if TS is None:
            TS = target_rows
        NR = _round_up(NR_al, TS)
        TB = 1

    # keep at least 2 grid steps when the problem allows (feeds both v7x TCs)
    if (B // TB) * (NR // TS) == 1:
        if TB > 1:
            for d in range(TB - 1, 0, -1):
                if B % d == 0:
                    TB = d
                    break
        elif TS > 8:
            TS = _round_up(-(-TS // 2), 8)
            NR = _round_up(NR_al, TS)
    return TB, TS, NR


def spatial_first_order_attn(x, weight, bias, s, offset, logdet=0.0, permute=False):
    """Forward (reverse=False) pass of _Spatial_first_order_attn.

    x:      (B, C, H, W) float32, H == W (as the PyTorch module assumes)
    weight: (C, C, 1), bias: (C,), s: (1, C, 1), offset: python float / scalar
    Returns (out (B, C, H, W), logdet (B,))
    """
    B, C, H, W = x.shape
    L = H * W
    x_flat = x.reshape(B, C, L)

    # Fold conv1d(kernel_size=1) + AvgPool over output channels.
    w2d = weight.reshape(C, C).astype(jnp.float32)
    w_mean = jnp.mean(w2d, axis=0).reshape(C, 1)                         # (C, 1)
    b_mean = jnp.mean(bias.astype(jnp.float32))
    shift = (b_mean + jnp.asarray(offset, jnp.float32).reshape(())).reshape(1, 1)
    s_sig = jax.nn.sigmoid(s.reshape(C, 1).astype(jnp.float32)) + 1e-6   # (C, 1)

    mask_parity = 0 if permute else 1

    # ---- spatial repack (B, C, L) -> (B, C, NR, 128), zero-padded tail ----
    NR0 = -(-L // 128)
    TB, TS, NR = _choose_tiles(B, C, NR0)
    L_pad = NR * 128
    n_pad = L_pad - L
    if n_pad:
        x_flat = jnp.pad(x_flat, ((0, 0), (0, 0), (0, n_pad)))
    x_rep = x_flat.reshape(B, C, NR, 128)

    n_bt = B // TB
    n_lt = NR // TS

    # ---- tile-invariant constants: mask folded into weights / s / (1-mask) ----
    # Checkerboard parity depends only on (channel + lane) because 128 | row offset.
    lane = jnp.arange(128, dtype=jnp.int32)[None, :]
    cidx = jnp.arange(C, dtype=jnp.int32)[:, None]
    mask_lane = ((cidx + lane) % 2) == mask_parity                       # (C, 128)
    wmask = jnp.where(mask_lane, w_mean, 0.0)                            # (C, 128)
    s_masked = jnp.where(mask_lane, s_sig, 0.0)                          # (C, 128)
    inv_mask = jnp.where(mask_lane, 0.0, 1.0)                            # (C, 128)
    consts = jnp.stack([wmask, s_masked, inv_mask], axis=0)              # (3, C, 128)

    cost = pl.CostEstimate(
        flops=5 * B * C * L_pad,
        transcendentals=2 * B * L_pad,
        bytes_accessed=2 * B * C * L_pad * 4 + 3 * C * 128 * 4,
    )

    kernel = functools.partial(_attn_kernel,
                               valid_limit=(L if n_pad else None))

    out_rep, ld_part = pl.pallas_call(
        kernel,
        grid=(n_bt, n_lt),
        in_specs=[
            pl.BlockSpec((TB, C, TS, 128), lambda bt, lt: (bt, 0, lt, 0)),   # x
            pl.BlockSpec((3, C, 128), lambda bt, lt: (0, 0, 0)),             # fused consts
            pl.BlockSpec(memory_space=pltpu.MemorySpace.SMEM),               # shift scalar
        ],
        out_specs=[
            pl.BlockSpec((TB, C, TS, 128), lambda bt, lt: (bt, 0, lt, 0)),   # out
            pl.BlockSpec((TB, 1, 1, 128), lambda bt, lt: (bt, lt, 0, 0)),    # logdet partials
        ],
        out_shape=[
            jax.ShapeDtypeStruct((B, C, NR, 128), x.dtype),
            jax.ShapeDtypeStruct((B, n_lt, 1, 128), jnp.float32),
        ],
        compiler_params=pltpu.CompilerParams(
            dimension_semantics=("parallel", "parallel"),
            vmem_limit_bytes=32 * 1024 * 1024),
        cost_estimate=cost,
    )(x_rep, consts, shift)

    # Batch-invariant logdet term sum_{c,l} log(sigmoid(s)+1e-6) * mask[c,l],
    # from exact per-channel mask population counts (no (C, L) materialization).
    c_idx = jnp.arange(C, dtype=jnp.int32)
    n_ones = jnp.where((c_idx % 2) == 1, (L + 1) // 2, L // 2).astype(jnp.float32)
    if permute:
        n_ones = jnp.float32(L) - n_ones
    const_ld = jnp.sum(jnp.log(s_sig.reshape(C)) * n_ones)

    logdet_out = logdet + jnp.sum(ld_part[:, :, 0, 0], axis=1) + const_ld

    out = out_rep.reshape(B, C, L_pad)[:, :, :L].reshape(B, C, H, W)
    return out, logdet_out


def _reference(x, weight, bias, s, offset, logdet=0.0, permute=False):
    """Pure-JAX reference replicating the original (unfolded) PyTorch forward math."""
    B, C, H, W = x.shape
    L = H * W
    c_idx = jnp.arange(C)[:, None]
    l_idx = jnp.arange(L)[None, :]
    mask = ((c_idx + l_idx) % 2).astype(x.dtype)
    if permute:
        mask = 1.0 - mask
    xm = x.reshape(B, C, L) * mask[None]
    w2d = weight.reshape(C, C)
    z = jnp.einsum('oc,bcl->bol', w2d, xm,
                   precision=lax.Precision.HIGHEST) + bias[None, :, None]
    pool = jnp.mean(z, axis=1)                                      # (B, L)
    attn = jax.nn.sigmoid(pool + offset) + 1e-6                     # (B, L)
    s_sig = jax.nn.sigmoid(s.reshape(C)) + 1e-6                     # (C,)
    attn_mask = ((1.0 - mask)[None] * attn[:, None, :]
                 + mask[None] * s_sig[None, :, None])               # (B, C, L)
    out = x.reshape(B, C, L) * attn_mask
    ld = logdet + jnp.sum((C // 2) * jnp.log(attn), axis=-1)
    ld = ld + jnp.sum(jnp.log(s_sig)[:, None] * mask)
    return out.reshape(B, C, H, W), ld


if __name__ == "__main__":
    key = jax.random.PRNGKey(0)

    def make_case(case_key, B, C, H, W, offset=8.0):
        kx, kw, kb, ks = jax.random.split(case_key, 4)
        fan_in = C * 1
        bound = 1.0 / math.sqrt(fan_in)
        weight = jax.random.uniform(kw, (C, C, 1), jnp.float32, -bound, bound)
        bias = jax.random.uniform(kb, (C,), jnp.float32, -bound, bound)
        s = jax.random.normal(ks, (1, C, 1), jnp.float32)
        x = jax.random.normal(kx, (B, C, H, W), jnp.float32)
        return x, weight, bias, s, offset

    cases = [
        ((2, 4, 16, 16), False),   # L=256: repacked + zero-padded to 8 rows of 128
        ((1, 4, 3, 3), True),      # tiny odd L, permute branch, heavy tail padding
        ((2, 8, 32, 32), False),   # L=1024: exact fit, no padding / validity mask
    ]
    for (B, C, H, W), permute in cases:
        key, sub = jax.random.split(key)
        x, weight, bias, s, offset = make_case(sub, B, C, H, W)

        out, logdet = spatial_first_order_attn(x, weight, bias, s, offset,
                                               permute=permute)
        out = jax.block_until_ready(out)
        logdet = jax.block_until_ready(logdet)

        out_ref, logdet_ref = _reference(x, weight, bias, s, offset, permute=permute)
        assert out.shape == (B, C, H, W) and logdet.shape == (B,)
        assert jnp.allclose(out, out_ref, rtol=1e-4, atol=1e-4), (B, C, H, W, permute)
        assert jnp.allclose(logdet, logdet_ref, rtol=1e-4, atol=1e-3), (B, C, H, W, permute)

    print("KERNEL_OK")
</pallas_src>

<mosaic_0001>
module attributes {stable_mosaic.version = 11 : i64} {
  func.func @_attn_kernel(%arg0: i32, %arg1: i32, %arg2: memref<1x4x8x128xf32, #tpu.memory_space<vmem>>, %arg3: memref<3x4x128xf32, #tpu.memory_space<vmem>>, %arg4: memref<1x1xf32, #tpu.memory_space<smem>>, %arg5: memref<1x4x8x128xf32, #tpu.memory_space<vmem>>, %arg6: memref<1x1x1x128xf32, #tpu.memory_space<vmem>>) attributes {dimension_semantics = [#tpu.dimension_semantics<parallel>, #tpu.dimension_semantics<parallel>], iteration_bounds = array<i64: 2, 1>, scalar_prefetch = 0 : i64, scratch_operands = 0 : i64, tpu.core_type = #tpu.core_type<tc>, window_params = [{transform_indices = @transform_0, window_bounds = array<i64: 1, 4, 8, 128>}, {pipeline_mode = #tpu.pipeline_mode<synchronous>, transform_indices = @transform_1, window_bounds = array<i64: 3, 4, 128>}, {transform_indices = @transform_2, window_bounds = array<i64: 1, 1>}, {transform_indices = @transform_3, window_bounds = array<i64: 1, 4, 8, 128>}, {transform_indices = @transform_4, window_bounds = array<i64: 1, 1, 1, 128>}]} {
    %c0 = arith.constant 0 : index
    %c0_0 = arith.constant 0 : index
    %c0_1 = arith.constant 0 : index
    %c0_2 = arith.constant 0 : index
    %0 = vector.load %arg2[%c0, %c0_0, %c0_1, %c0_2] : memref<1x4x8x128xf32, #tpu.memory_space<vmem>>, vector<1x4x8x128xf32>
    %c0_3 = arith.constant 0 : index
    %c0_4 = arith.constant 0 : index
    %c0_5 = arith.constant 0 : index
    %1 = vector.load %arg3[%c0_3, %c0_4, %c0_5] : memref<3x4x128xf32, #tpu.memory_space<vmem>>, vector<1x4x128xf32>
    %2 = vector.shape_cast %1 : vector<1x4x128xf32> to vector<4x128xf32>
    %c1 = arith.constant 1 : index
    %c0_6 = arith.constant 0 : index
    %c0_7 = arith.constant 0 : index
    %3 = vector.load %arg3[%c1, %c0_6, %c0_7] : memref<3x4x128xf32, #tpu.memory_space<vmem>>, vector<1x4x128xf32>
    %4 = vector.shape_cast %3 : vector<1x4x128xf32> to vector<4x128xf32>
    %c2 = arith.constant 2 : index
    %c0_8 = arith.constant 0 : index
    %c0_9 = arith.constant 0 : index
    %5 = vector.load %arg3[%c2, %c0_8, %c0_9] : memref<3x4x128xf32, #tpu.memory_space<vmem>>, vector<1x4x128xf32>
    %6 = vector.shape_cast %5 : vector<1x4x128xf32> to vector<4x128xf32>
    %c0_10 = arith.constant 0 : index
    %c0_11 = arith.constant 0 : index
    %7 = memref.load %arg4[%c0_10, %c0_11] : memref<1x1xf32, #tpu.memory_space<smem>>
    %8 = vector.extract_strided_slice %0 {offsets = [0, 0, 0, 0], sizes = [1, 1, 8, 128], strides = [1, 1, 1, 1]} : vector<1x4x8x128xf32> to vector<1x1x8x128xf32>
    %9 = vector.shape_cast %8 : vector<1x1x8x128xf32> to vector<1x8x128xf32>
    %10 = vector.extract_strided_slice %2 {offsets = [0, 0], sizes = [1, 128], strides = [1, 1]} : vector<4x128xf32> to vector<1x128xf32>
    %11 = vector.shape_cast %10 : vector<1x128xf32> to vector<128xf32>
    %12 = vector.shape_cast %11 : vector<128xf32> to vector<1x1x128xf32>
    %13 = vector.broadcast %12 : vector<1x1x128xf32> to vector<1x8x128xf32>
    %14 = arith.mulf %9, %13 : vector<1x8x128xf32>
    %15 = vector.extract_strided_slice %0 {offsets = [0, 1, 0, 0], sizes = [1, 1, 8, 128], strides = [1, 1, 1, 1]} : vector<1x4x8x128xf32> to vector<1x1x8x128xf32>
    %16 = vector.shape_cast %15 : vector<1x1x8x128xf32> to vector<1x8x128xf32>
    %17 = vector.extract_strided_slice %2 {offsets = [1, 0], sizes = [1, 128], strides = [1, 1]} : vector<4x128xf32> to vector<1x128xf32>
    %18 = vector.shape_cast %17 : vector<1x128xf32> to vector<128xf32>
    %19 = vector.shape_cast %18 : vector<128xf32> to vector<1x1x128xf32>
    %20 = vector.broadcast %19 : vector<1x1x128xf32> to vector<1x8x128xf32>
    %21 = arith.mulf %16, %20 : vector<1x8x128xf32>
    %22 = arith.addf %14, %21 : vector<1x8x128xf32>
    %23 = vector.extract_strided_slice %0 {offsets = [0, 2, 0, 0], sizes = [1, 1, 8, 128], strides = [1, 1, 1, 1]} : vector<1x4x8x128xf32> to vector<1x1x8x128xf32>
    %24 = vector.shape_cast %23 : vector<1x1x8x128xf32> to vector<1x8x128xf32>
    %25 = vector.extract_strided_slice %2 {offsets = [2, 0], sizes = [1, 128], strides = [1, 1]} : vector<4x128xf32> to vector<1x128xf32>
    %26 = vector.shape_cast %25 : vector<1x128xf32> to vector<128xf32>
    %27 = vector.shape_cast %26 : vector<128xf32> to vector<1x1x128xf32>
    %28 = vector.broadcast %27 : vector<1x1x128xf32> to vector<1x8x128xf32>
    %29 = arith.mulf %24, %28 : vector<1x8x128xf32>
    %30 = arith.addf %22, %29 : vector<1x8x128xf32>
    %31 = vector.extract_strided_slice %0 {offsets = [0, 3, 0, 0], sizes = [1, 1, 8, 128], strides = [1, 1, 1, 1]} : vector<1x4x8x128xf32> to vector<1x1x8x128xf32>
    %32 = vector.shape_cast %31 : vector<1x1x8x128xf32> to vector<1x8x128xf32>
    %33 = vector.extract_strided_slice %2 {offsets = [3, 0], sizes = [1, 128], strides = [1, 1]} : vector<4x128xf32> to vector<1x128xf32>
    %34 = vector.shape_cast %33 : vector<1x128xf32> to vector<128xf32>
    %35 = vector.shape_cast %34 : vector<128xf32> to vector<1x1x128xf32>
    %36 = vector.broadcast %35 : vector<1x1x128xf32> to vector<1x8x128xf32>
    %37 = arith.mulf %32, %36 : vector<1x8x128xf32>
    %38 = arith.addf %30, %37 : vector<1x8x128xf32>
    %39 = vector.broadcast %7 : f32 to vector<1x8x128xf32>
    %40 = arith.addf %38, %39 : vector<1x8x128xf32>
    %41 = arith.negf %40 : vector<1x8x128xf32>
    %42 = math.exp %41 : vector<1x8x128xf32>
    %cst = arith.constant 1.000000e+00 : f32
    %43 = vector.broadcast %cst : f32 to vector<1x8x128xf32>
    %44 = arith.addf %43, %42 : vector<1x8x128xf32>
    %45 = arith.divf %43, %44 : vector<1x8x128xf32>
    %cst_12 = arith.constant 9.99999997E-7 : f32
    %46 = vector.broadcast %cst_12 : f32 to vector<1x8x128xf32>
    %47 = arith.addf %45, %46 : vector<1x8x128xf32>
    %48 = vector.shape_cast %4 : vector<4x128xf32> to vector<1x4x1x128xf32>
    %49 = vector.shape_cast %6 : vector<4x128xf32> to vector<1x4x1x128xf32>
    %50 = vector.shape_cast %47 : vector<1x8x128xf32> to vector<1x1x8x128xf32>
    %51 = vector.broadcast %49 : vector<1x4x1x128xf32> to vector<1x4x8x128xf32>
    %52 = vector.broadcast %50 : vector<1x1x8x128xf32> to vector<1x4x8x128xf32>
    %53 = arith.mulf %51, %52 : vector<1x4x8x128xf32>
    %54 = vector.broadcast %48 : vector<1x4x1x128xf32> to vector<1x4x8x128xf32>
    %55 = arith.addf %54, %53 : vector<1x4x8x128xf32>
    %56 = arith.mulf %0, %55 : vector<1x4x8x128xf32>
    %c0_13 = arith.constant 0 : index
    %c0_14 = arith.constant 0 : index
    %c0_15 = arith.constant 0 : index
    %c0_16 = arith.constant 0 : index
    %57 = vector.load %arg5[%c0_13, %c0_14, %c0_15, %c0_16] : memref<1x4x8x128xf32, #tpu.memory_space<vmem>>, vector<1x4x8x128xf32>
    tpu.vector_store %arg5[%c0_13, %c0_14, %c0_15, %c0_16], %56 {strides = array<i32>} : memref<1x4x8x128xf32, #tpu.memory_space<vmem>>, vector<1x4x8x128xf32>,
    %58 = math.log %47 : vector<1x8x128xf32>
    %59 = tpu.iota {dimensions = array<i32: 0>} : vector<8x128xi32>
    %60 = tpu.iota {dimensions = array<i32: 1>} : vector<8x128xi32>
    %c8_i32 = arith.constant 8 : i32
    %61 = arith.muli %arg1, %c8_i32 : i32
    %62 = vector.broadcast %61 : i32 to vector<8x128xi32>
    %63 = arith.addi %62, %59 : vector<8x128xi32>
    %c128_i32 = arith.constant 128 : i32
    %64 = vector.broadcast %c128_i32 : i32 to vector<8x128xi32>
    %65 = arith.muli %63, %64 : vector<8x128xi32>
    %66 = arith.addi %65, %60 : vector<8x128xi32>
    %c256_i32 = arith.constant 256 : i32
    %67 = vector.broadcast %c256_i32 : i32 to vector<8x128xi32>
    %68 = arith.cmpi slt, %66, %67 : vector<8x128xi32>
    %69 = vector.shape_cast %68 : vector<8x128xi1> to vector<1x8x128xi1>
    %cst_17 = arith.constant 0.000000e+00 : f32
    %70 = vector.broadcast %cst_17 : f32 to vector<1x8x128xf32>
    %71 = arith.select %69, %58, %70 : vector<1x8x128xi1>, vector<1x8x128xf32>
    %cst_18 = arith.constant dense<0.000000e+00> : vector<1xf32>
    %72 = vector.multi_reduction <add>, %71, %cst_18 [1, 2] : vector<1x8x128xf32> to vector<1xf32>
    %cst_19 = arith.constant 2.000000e+00 : f32
    %73 = vector.broadcast %cst_19 : f32 to vector<1xf32>
    %74 = arith.mulf %73, %72 : vector<1xf32>
    %75 = vector.shape_cast %74 : vector<1xf32> to vector<1x1x1x1xf32>
    %76 = vector.shape_cast %75 : vector<1x1x1x1xf32> to vector<1x1x1x1xf32>
    %77 = vector.broadcast %76 : vector<1x1x1x1xf32> to vector<1x1x1x128xf32>
    %c0_20 = arith.constant 0 : index
    %c0_21 = arith.constant 0 : index
    %c0_22 = arith.constant 0 : index
    %c0_23 = arith.constant 0 : index
    %78 = vector.load %arg6[%c0_20, %c0_21, %c0_22, %c0_23] : memref<1x1x1x128xf32, #tpu.memory_space<vmem>>, vector<1x1x1x128xf32>
    tpu.vector_store %arg6[%c0_20, %c0_21, %c0_22, %c0_23], %77 {strides = array<i32>} : memref<1x1x1x128xf32, #tpu.memory_space<vmem>>, vector<1x1x1x128xf32>,
    return
  }
  func.func @transform_0(%arg0: i32, %arg1: i32) -> (i32, i32, i32, i32) {
    %c0_i32 = arith.constant 0 : i32
    %c0_i32_0 = arith.constant 0 : i32
    %c0_i32_1 = arith.constant 0 : i32
    return %arg0, %c0_i32, %arg1, %c0_i32_0 : i32, i32, i32, i32
  }
  func.func @transform_1(%arg0: i32, %arg1: i32) -> (i32, i32, i32) {
    %c0_i32 = arith.constant 0 : i32
    %c0_i32_0 = arith.constant 0 : i32
    %c0_i32_1 = arith.constant 0 : i32
    %c0_i32_2 = arith.constant 0 : i32
    return %c0_i32, %c0_i32_0, %c0_i32_1 : i32, i32, i32
  }
  func.func @transform_2(%arg0: i32, %arg1: i32) -> (i32, i32) {
    %c0_i32 = arith.constant 0 : i32
    %c0_i32_0 = arith.constant 0 : i32
    %c0_i32_1 = arith.constant 0 : i32
    return %c0_i32, %c0_i32_0 : i32, i32
  }
  func.func @transform_3(%arg0: i32, %arg1: i32) -> (i32, i32, i32, i32) {
    %c0_i32 = arith.constant 0 : i32
    %c0_i32_0 = arith.constant 0 : i32
    %c0_i32_1 = arith.constant 0 : i32
    return %arg0, %c0_i32, %arg1, %c0_i32_0 : i32, i32, i32, i32
  }
  func.func @transform_4(%arg0: i32, %arg1: i32) -> (i32, i32, i32, i32) {
    %c0_i32 = arith.constant 0 : i32
    %c0_i32_0 = arith.constant 0 : i32
    %c0_i32_1 = arith.constant 0 : i32
    return %arg0, %arg1, %c0_i32, %c0_i32_0 : i32, i32, i32, i32
  }
}

</mosaic_0001>

<llo_original>
// kernel: tpu_custom_call.1
$region0: #{tpu_custom_call.1}
  #allocation0 [shape = 'u32[]', space=smem, size = 0x4, offset = 0x4, fixed_abs, tag = 'smem constant byte address 0x4 - core index']
  #allocation1 [shape = 'u32[144,128]{1,0:T(1,128)}', space=vmem, size = 0x12000, scoped, tag = 'internal scratch']
  #allocation2 [shape = 'f32[1,1]{1,0:T(1,128)S(6)}', space=smem, size = 0x200, scoped, tag = 'scoped memory for tpu_custom_call.1']
  %s0 = inlined_call_operand.hbm [shape: f32[2,4,8,128], index: 0, kind: input, shape index: {}]
  %s1 = inlined_call_operand.hbm [shape: f32[3,4,128], index: 1, kind: input, shape index: {}]
  %s2 = inlined_call_operand.<no memory space> [shape: f32[1,1], index: 2, kind: input, shape index: {}]
  %s3 = inlined_call_operand.hbm [shape: f32[2,4,8,128], index: 3, kind: output, shape index: {0}]
  %s4 = inlined_call_operand.hbm [shape: f32[2,1,1,128], index: 4, kind: output, shape index: {1}]
  %5 = xla_tuple %s3, %s4
  %s6 = sld [smem:[#allocation0]]
  $region61: #{tpu_custom_call.1} parent=0
    _
  %s8 = ssub.s32 1, %s6
  %s9 = scalar_select 0, %s8, %s6
  %10 = sst [smem:[#allocation2]] %s2
  $region1: #{tpu_custom_call.1} parent=0
    #allocation3 [shape = 'u8[32768]{0}', space=vmem, size = 0x8000, scoped, tag = 'input window, operand 0']
    #allocation4 [shape = 's32[2]{0}', space=sflag, size = 0x8, scoped, tag = 'scoped memory for tpu_custom_call.1']
    #allocation5 [shape = 's32[2]{0}', space=sflag, size = 0x8, scoped, tag = 'scoped memory for tpu_custom_call.1']
    #allocation6 [shape = 'u8[6144]{0}', space=vmem, size = 0x1800, scoped, tag = 'input window, operand 1, single buffered']
    #allocation7 [shape = 's32[1]{0}', space=sflag, size = 0x4, scoped, tag = 'scoped memory for tpu_custom_call.1']
    #allocation8 [shape = 'u8[32768]{0}', space=vmem, size = 0x8000, scoped, tag = 'output window, operand 0']
    #allocation9 [shape = 'u8[1024]{0}', space=vmem, size = 0x400, scoped, tag = 'output window, operand 1']
    #allocation10 [shape = 's32[2]{0}', space=sflag, size = 0x8, scoped, tag = 'scoped memory for tpu_custom_call.1']
    %11 = vsyncpa [#allocation4], 0
    %s12 = scalar_lea.sflag [#allocation4], 1
    %13 = vsyncpa %s12, 0
    %14 = vsyncpa [#allocation7], 0
    %15 = vsyncpa [#allocation5], 0
    %s16 = scalar_lea.sflag [#allocation5], 1
    %17 = vsyncpa %s16, 0
    %18 = vsyncpa [#allocation10], 0
    %s19 = scalar_lea.sflag [#allocation10], 1
    %20 = vsyncpa %s19, 0
    loop: start=0, step=1, limit=4
    $region2: #{tpu_custom_call.1} parent=1 // loop_pre_header
      _
    $region3: #{tpu_custom_call.1} parent=1 // loop_header
      %s22 = sphi 0, %s26
      %p23 = scmp.ge.s32.totalorder %s22, 4
      %s29 = sphi 0, %s41
      %s30 = sphi 0, %s37
      %s31 = sphi 0, %s29
      %s32 = sphi 0, %s30
      %s33 = sphi 0, %s31
      %s34 = sphi 0, %s32
      %s46 = sphi 0, %s48
      %s49 = sphi 0, %s46
      %s50 = sphi 0, %s49
      %s66 = sphi 0, %s50
      %s70 = sphi 0, %s70
      %s72 = sphi 0, %s70
      %s73 = sphi 0, %s72
      %s87 = sphi 0, %s73
      %s91 = sphi 0, %s91
      %s93 = sphi 0, %s91
      %s94 = sphi 0, %s93
      %s108 = sphi 0, %s94
      %s116 = sphi 0, %s118
      %s119 = sphi 0, %s116
      %s120 = sphi 0, %s119
      %s136 = sphi 0, %s120
      %s144 = sphi 0, %s146
      %s147 = sphi 0, %s144
      %s148 = sphi 0, %s147
      %s164 = sphi 0, %s148
    $region4: #{tpu_custom_call.1} parent=1 // loop_header_branch
      %25 = sbr.rel (%p23) target = $region8
    $region5: #{tpu_custom_call.1} parent=1 // loop_body
      %s27 = ssub.s32 %s22, 1
      %s28 = ssub.s32 %s22, 2
      %s35 = sadd.s32 1, %s30
      %p36 = scmp.ge.s32.totalorder %s35, 1
      %s37 = scalar_select %p36, 0, %s35
      %s38 = sadd.s32 1, %s29
      %s39 = scalar_select %p36, %s38, %s29
      %p40 = scmp.ge.s32.totalorder %s39, 2
      %s41 = scalar_select %p40, 0, %s39
      %s42 = ssub.s32 %s29, %s41
      %s43 = ssub.s32 %s30, %s37
      %s44 = sor.u32 %s42, %s43
      %p45 = scmp.eq.s32.totalorder %s44, 0
      %s47 = sadd.s32 %s46, 1
      %s48 = scalar_select %p45, %s46, %s47
      %p51 = pneg %p45
      %p52 = scmp.eq.s32.totalorder %s22, 1
      %p53 = por %p51, %p52
      %p54 = scmp.ne.s32.totalorder %s46, %s49
      %p55 = scmp.eq.s32.totalorder %s22, 0
      %p56 = por %p54, %p55
      %p57 = scmp.ne.s32.totalorder %s46, %s49
      %p58 = scmp.eq.s32.totalorder %s27, 1
      %p59 = por %p57, %p58
      %p60 = scmp.ne.s32.totalorder %s49, %s50
      %p61 = scmp.eq.s32.totalorder %s27, 0
      %p62 = por %p60, %p61
      %p63 = scmp.ne.s32.totalorder %s49, %s50
      %p64 = scmp.eq.s32.totalorder %s28, 1
      %p65 = por %p63, %p64
      %p67 = scmp.ne.s32.totalorder %s50, %s66
      %p68 = scmp.eq.s32.totalorder %s28, 0
      %p69 = por %p67, %p68
      %s71 = sadd.s32 %s70, 1
      %p74 = scmp.eq.s32.totalorder %s22, 1
      %p75 = scmp.ne.s32.totalorder %s70, %s72
      %p76 = scmp.eq.s32.totalorder %s22, 0
      %p77 = por %p75, %p76
      %p78 = scmp.ne.s32.totalorder %s70, %s72
      %p79 = scmp.eq.s32.totalorder %s27, 1
      %p80 = por %p78, %p79
      %p81 = scmp.ne.s32.totalorder %s72, %s73
      %p82 = scmp.eq.s32.totalorder %s27, 0
      %p83 = por %p81, %p82
      %p84 = scmp.ne.s32.totalorder %s72, %s73
      %p85 = scmp.eq.s32.totalorder %s28, 1
      %p86 = por %p84, %p85
      %p88 = scmp.ne.s32.totalorder %s73, %s87
      %p89 = scmp.eq.s32.totalorder %s28, 0
      %p90 = por %p88, %p89
      %s92 = sadd.s32 %s91, 1
      %p95 = scmp.eq.s32.totalorder %s22, 1
      %p96 = scmp.ne.s32.totalorder %s91, %s93
      %p97 = scmp.eq.s32.totalorder %s22, 0
      %p98 = por %p96, %p97
      %p99 = scmp.ne.s32.totalorder %s91, %s93
      %p100 = scmp.eq.s32.totalorder %s27, 1
      %p101 = por %p99, %p100
      %p102 = scmp.ne.s32.totalorder %s93, %s94
      %p103 = scmp.eq.s32.totalorder %s27, 0
      %p104 = por %p102, %p103
      %p105 = scmp.ne.s32.totalorder %s93, %s94
      %p106 = scmp.eq.s32.totalorder %s28, 1
      %p107 = por %p105, %p106
      %p109 = scmp.ne.s32.totalorder %s94, %s108
      %p110 = scmp.eq.s32.totalorder %s28, 0
      %p111 = por %p109, %p110
      %s112 = ssub.s32 %s29, %s41
      %s113 = ssub.s32 %s30, %s37
      %s114 = sor.u32 %s112, %s113
      %p115 = scmp.eq.s32.totalorder %s114, 0
      %s117 = sadd.s32 %s116, 1
      %s118 = scalar_select %p115, %s116, %s117
      %p121 = pneg %p115
      %p122 = scmp.eq.s32.totalorder %s22, 1
      %p123 = por %p121, %p122
      %p124 = scmp.ne.s32.totalorder %s116, %s119
      %p125 = scmp.eq.s32.totalorder %s22, 0
      %p126 = por %p124, %p125
      %p127 = scmp.ne.s32.totalorder %s116, %s119
      %p128 = scmp.eq.s32.totalorder %s27, 1
      %p129 = por %p127, %p128
      %p130 = scmp.ne.s32.totalorder %s119, %s120
      %p131 = scmp.eq.s32.totalorder %s27, 0
      %p132 = por %p130, %p131
      %p133 = scmp.ne.s32.totalorder %s119, %s120
      %p134 = scmp.eq.s32.totalorder %s28, 1
      %p135 = por %p133, %p134
      %p137 = scmp.ne.s32.totalorder %s120, %s136
      %p138 = scmp.eq.s32.totalorder %s28, 0
      %p139 = por %p137, %p138
      %s140 = ssub.s32 %s29, %s41
      %s141 = ssub.s32 %s30, %s37
      %s142 = sor.u32 %s140, %s141
      %p143 = scmp.eq.s32.totalorder %s142, 0
      %s145 = sadd.s32 %s144, 1
      %s146 = scalar_select %p143, %s144, %s145
      %p149 = pneg %p143
      %p150 = scmp.eq.s32.totalorder %s22, 1
      %p151 = por %p149, %p150
      %p152 = scmp.ne.s32.totalorder %s144, %s147
      %p153 = scmp.eq.s32.totalorder %s22, 0
      %p154 = por %p152, %p153
      %p155 = scmp.ne.s32.totalorder %s144, %s147
      %p156 = scmp.eq.s32.totalorder %s27, 1
      %p157 = por %p155, %p156
      %p158 = scmp.ne.s32.totalorder %s147, %s148
      %p159 = scmp.eq.s32.totalorder %s27, 0
      %p160 = por %p158, %p159
      %p161 = scmp.ne.s32.totalorder %s147, %s148
      %p162 = scmp.eq.s32.totalorder %s28, 1
      %p163 = por %p161, %p162
      %p165 = scmp.ne.s32.totalorder %s148, %s164
      %p166 = scmp.eq.s32.totalorder %s28, 0
      %p167 = por %p165, %p166
      %p168 = scmp.le.s32.totalorder 1, %s22
      %p169 = scmp.lt.s32.totalorder %s22, 3
      %p170 = pnand %p168, %p169
      %p171 = pneg %p170
      // Predicated region
      $region9: #{tpu_custom_call.1} parent=5 // pred_check
        _
      $region10: #{tpu_custom_call.1} parent=5 // pred_check_branch
        %173 = sbr.rel (%p170) target = $region12
      $region11: #{tpu_custom_call.1} parent=5 // pred_region
        %s174 = ssub.s32 %s22, 1
        // Predicated region
        $region13: #{tpu_custom_call.1} parent=11 // pred_check
          %p175 = pneg %p83
        $region14: #{tpu_custom_call.1} parent=11 // pred_check_branch
          %177 = sbr.rel (%p175) target = $region16
        $region15: #{tpu_custom_call.1} parent=11 // pred_region
          %s179 = ssub.s32 192, 192
          %180 = vsyncadd [#allocation7], %s179
          %s181 = sshll.u32 [#allocation6], 4
          %s182 = int_to_ptr.vmem [resolvable:$true] %s181
          %187 = dma.hbm_to_vmem [thread:$0]  %s1, 192, %s182, [#allocation7], 64, 64, 4
        $region16: #{tpu_custom_call.1} parent=11 // pred_fallthru
          _
        // Predicated region
        $region17: #{tpu_custom_call.1} parent=11 // pred_check
          %p188 = pneg %p104
        $region18: #{tpu_custom_call.1} parent=11 // pred_check_branch
          %190 = sbr.rel (%p188) target = $region20
        $region19: #{tpu_custom_call.1} parent=11 // pred_region
          _
        $region20: #{tpu_custom_call.1} parent=11 // pred_fallthru
          _
      $region12: #{tpu_custom_call.1} parent=5 // pred_fallthru
        _
      %p191 = scmp.lt.s32.totalorder %s22, 2
      // Predicated region
      $region21: #{tpu_custom_call.1} parent=5 // pred_check
        %p192 = pneg %p191
      $region22: #{tpu_custom_call.1} parent=5 // pred_check_branch
        %194 = sbr.rel (%p192) target = $region24
      $region23: #{tpu_custom_call.1} parent=5 // pred_region
        // Predicated region
        $region25: #{tpu_custom_call.1} parent=23 // pred_check
          %p195 = pneg %p56
        $region26: #{tpu_custom_call.1} parent=23 // pred_check_branch
          %197 = sbr.rel (%p195) target = $region28
        $region27: #{tpu_custom_call.1} parent=23 // pred_region
          %s198 = sand.u32 %s46, 1
          %s199 = scalar_lea.sflag [#allocation4], %s198
          %s200 = sand.u32 %s46, 1
          %s201 = smul.addr %s200, 32
          %s202 = scalar_lea.vmem [#allocation3], %s201
          %s204 = ssub.s32 512, 512
          %205 = vsyncadd %s199, %s204
          %s206 = smul.addr %s29, 4
          %s207 = sadd.s32 %s30, %s206
          %s208 = smul.addr %s207, 128
          %s209 = scalar_lea.hbm %s0, %s208
          %s210 = sshll.u32 %s202, 4
          %s211 = int_to_ptr.vmem [resolvable:$true] %s210
          %216 = dma.hbm_to_vmem [thread:$0]  %s209, 512, %s211, %s199, 128, 128, 8
        $region28: #{tpu_custom_call.1} parent=23 // pred_fallthru
          _
      $region24: #{tpu_custom_call.1} parent=5 // pred_fallthru
        _
      %p217 = scmp.le.s32.totalorder 1, %s22
      %p218 = scmp.lt.s32.totalorder %s22, 3
      %p219 = pnand %p217, %p218
      %p220 = pneg %p219
      // Predicated region
      $region29: #{tpu_custom_call.1} parent=5 // pred_check
        _
      $region30: #{tpu_custom_call.1} parent=5 // pred_check_branch
        %222 = sbr.rel (%p219) target = $region32
      $region31: #{tpu_custom_call.1} parent=5 // pred_region
        %s223 = ssub.s32 %s22, 1
        %s224 = sand.u32 %s49, 1
        %s225 = scalar_lea.sflag [#allocation4], %s224
        %s226 = sand.u32 %s49, 1
        %s227 = smul.addr %s226, 32
        %s228 = scalar_lea.vmem [#allocation3], %s227
        // Predicated region
        $region33: #{tpu_custom_call.1} parent=31 // pred_check
          %p229 = pneg %p62
        $region34: #{tpu_custom_call.1} parent=31 // pred_check_branch
          %231 = sbr.rel (%p229) target = $region36
        $region35: #{tpu_custom_call.1} parent=31 // pred_region
          %232 = dma.done %s225, 512
        $region36: #{tpu_custom_call.1} parent=31 // pred_fallthru
          _
        // Predicated region
        $region37: #{tpu_custom_call.1} parent=31 // pred_check
          %p233 = pneg %p83
        $region38: #{tpu_custom_call.1} parent=31 // pred_check_branch
          %235 = sbr.rel (%p233) target = $region40
        $region39: #{tpu_custom_call.1} parent=31 // pred_region
          %236 = dma.done [#allocation7], 192
        $region40: #{tpu_custom_call.1} parent=31 // pred_fallthru
          _
        %s237 = sand.u32 %s49, 1
        %s238 = scalar_lea.sflag [#allocation4], %s237
        %s239 = sand.u32 %s49, 1
        %s240 = smul.addr %s239, 32
        %s241 = scalar_lea.vmem [#allocation3], %s240
        %p242 = pneg %p62
        %p243 = pneg %p59
        %p244 = pneg %p83
        %p245 = pneg %p80
        %p246 = pneg %p104
        %p247 = pneg %p101
        %p248 = pneg %p132
        %p249 = pneg %p129
        %s250 = sand.u32 %s119, 1
        %s251 = scalar_lea.sflag [#allocation5], %s250
        %s252 = sand.u32 %s119, 1
        %s253 = smul.addr %s252, 32
        %s254 = scalar_lea.vmem [#allocation8], %s253
        %p255 = pneg %p160
        %p256 = pneg %p157
        %s257 = sand.u32 %s147, 1
        %s258 = scalar_lea.sflag [#allocation10], %s257
        %s259 = sand.u32 %s147, 1
        %s260 = scalar_lea.vmem [#allocation9], %s259
        %v261 = vld [vmem:[%s228] sm:$0xff]
        %v262 = vld [vmem:[%s228 + $0x8] sm:$0xff]
        %v263 = vld [vmem:[%s228 + $0x10] sm:$0xff]
        %v264 = vld [vmem:[%s228 + $0x18] sm:$0xff]
        %v265 = vld [vmem:[#allocation6] sm:$0xf]
        %s266 = scalar_lea.vmem [#allocation6], 4
        %v267 = vld [vmem:[%s266] sm:$0xf]
        %s268 = scalar_lea.vmem [#allocation6], 8
        %v269 = vld [vmem:[%s268] sm:$0xf]
        %s270 = sld [smem:[#allocation2]]
        %v271 = vlaneseq
        %v272 = vshrl.u32 %v271, 7
        %v273 = vsub.s32 0, %v272
        %v274 = vrot.slane %v265, %v273
        %v275 = vmul.f32 %v261, %v274
        %v276 = vlaneseq
        %v277 = vshrl.u32 %v276, 7
        %v278 = vsub.s32 1, %v277
        %v279 = vrot.slane %v265, %v278
        %v280 = vmul.f32 %v262, %v279
        %v281 = vadd.f32 %v275, %v280
        %v282 = vlaneseq
        %v283 = vshrl.u32 %v282, 7
        %v284 = vsub.s32 2, %v283
        %v285 = vrot.slane %v265, %v284
        %v286 = vmul.f32 %v263, %v285
        %v287 = vadd.f32 %v281, %v286
        %v288 = vlaneseq
        %v289 = vshrl.u32 %v288, 7
        %v290 = vsub.s32 3, %v289
        %v291 = vrot.slane %v265, %v290
        %v292 = vmul.f32 %v264, %v291
        %v293 = vadd.f32 %v287, %v292
        %v294 = vstv %s270
        %v295 = vadd.f32 %v293, %v294
        %v296 = vxor.u32 %v295, 2147483648
        %v297 = vmul.f32 %v296, 1.442695
        %v298 = vpow.pop %v297
        %v299 = vadd.f32 %v298, 1.0
        %v300 = vrcp.pop %v299
        %v301 = vmul.f32 1.0, %v300
        %v302 = vadd.f32 %v301, 1e-06
        %v305 = vunpack.c.l.s4 1966171168
        %v306 = vunpack.c.0.s8 %v305
        %v307 = vlaneseq
        %v308 = vshrl.u32 %v307, 7
        %v309 = vsub.s32 %v306, %v308
        %v310 = vrot.slane %v267, %v309
        %v311 = vcombine.high %v310, %v310
        %v313 = vunpack.c.l.s4 1966171168
        %v314 = vunpack.c.0.s8 %v313
        %v315 = vlaneseq
        %v316 = vshrl.u32 %v315, 7
        %v317 = vsub.s32 %v314, %v316
        %v318 = vrot.slane %v310, %v317
        %v320 = vunpack.c.l.s4 1966171168
        %v321 = vunpack.c.0.s8 %v320
        %v322 = vlaneseq
        %v323 = vshrl.u32 %v322, 7
        %v324 = vsub.s32 %v321, %v323
        %v325 = vrot.slane %v311, %v324
        %v326 = vcombine.high %v318, %v318
        %v327 = vcombine.high %v325, %v325
        %v330 = vunpack.c.l.s4 1966171168
        %v331 = vunpack.c.0.s8 %v330
        %v332 = vlaneseq
        %v333 = vshrl.u32 %v332, 7
        %v334 = vsub.s32 %v331, %v333
        %v335 = vrot.slane %v269, %v334
        %v336 = vcombine.high %v335, %v335
        %v338 = vunpack.c.l.s4 1966171168
        %v339 = vunpack.c.0.s8 %v338
        %v340 = vlaneseq
        %v341 = vshrl.u32 %v340, 7
        %v342 = vsub.s32 %v339, %v341
        %v343 = vrot.slane %v335, %v342
        %v345 = vunpack.c.l.s4 1966171168
        %v346 = vunpack.c.0.s8 %v345
        %v347 = vlaneseq
        %v348 = vshrl.u32 %v347, 7
        %v349 = vsub.s32 %v346, %v348
        %v350 = vrot.slane %v336, %v349
        %v351 = vcombine.high %v343, %v343
        %v352 = vcombine.high %v350, %v350
        %v353 = vlaneseq
        %v354 = vshrl.u32 %v353, 7
        %v355 = vsub.s32 0, %v354
        %v356 = vrot.slane %v343, %v355
        %v357 = vlaneseq
        %v358 = vshrl.u32 %v357, 7
        %v359 = vsub.s32 0, %v358
        %v360 = vrot.slane %v350, %v359
        %v361 = vlaneseq
        %v362 = vshrl.u32 %v361, 7
        %v363 = vsub.s32 0, %v362
        %v364 = vrot.slane %v351, %v363
        %v365 = vlaneseq
        %v366 = vshrl.u32 %v365, 7
        %v367 = vsub.s32 0, %v366
        %v368 = vrot.slane %v352, %v367
        %v373 = vmul.f32 %v356, %v302
        %v374 = vmul.f32 %v360, %v302
        %v375 = vmul.f32 %v364, %v302
        %v376 = vmul.f32 %v368, %v302
        %v377 = vlaneseq
        %v378 = vshrl.u32 %v377, 7
        %v379 = vsub.s32 0, %v378
        %v380 = vrot.slane %v318, %v379
        %v381 = vlaneseq
        %v382 = vshrl.u32 %v381, 7
        %v383 = vsub.s32 0, %v382
        %v384 = vrot.slane %v325, %v383
        %v385 = vlaneseq
        %v386 = vshrl.u32 %v385, 7
        %v387 = vsub.s32 0, %v386
        %v388 = vrot.slane %v326, %v387
        %v389 = vlaneseq
        %v390 = vshrl.u32 %v389, 7
        %v391 = vsub.s32 0, %v390
        %v392 = vrot.slane %v327, %v391
        %v397 = vadd.f32 %v380, %v373
        %v398 = vadd.f32 %v384, %v374
        %v399 = vadd.f32 %v388, %v375
        %v400 = vadd.f32 %v392, %v376
        %v401 = vmul.f32 %v261, %v397
        %v402 = vmul.f32 %v262, %v398
        %v403 = vmul.f32 %v263, %v399
        %v404 = vmul.f32 %v264, %v400
        %405 = vst [vmem:[%s254] sm:$0xff] %v401
        %406 = vst [vmem:[%s254 + $0x8] sm:$0xff] %v402
        %407 = vst [vmem:[%s254 + $0x10] sm:$0xff] %v403
        %408 = vst [vmem:[%s254 + $0x18] sm:$0xff] %v404
        %v409 = vlog2.pop %v302
        %v410 = vmul.f32 %v409, 0.6931472
        %v411 = vlaneseq
        %v412 = vshrl.u32 %v411, 7
        %v413 = vlaneseq
        %v414 = vand.u32 %v413, 127
        %s415 = smul.u32 %s32, 8
        %v416 = vstv %s415
        %v417 = vadd.s32 %v416, %v412
        %v418 = vmul.u32 %v417, 128
        %v419 = vadd.s32 %v418, %v414
        %vm420 = vcmp.lt.s32.totalorder %v419, 256
        %v421 = vsel %vm420, %v410, 0.0
        %422 = vadd.xlane.f32.xlu0 %v421
        %v423 = vpop.xlane.xlu0 %422
        %v424 = vrot.slane %v423, 4
        %v425 = vadd.f32 %v423, %v424
        %v426 = vrot.slane %v425, 2
        %v427 = vadd.f32 %v425, %v426
        %v428 = vrot.slane %v427, 1
        %v429 = vadd.f32 %v427, %v428
        %v430 = vmul.f32 %v429, 2.0
        %431 = vst [vmem:[%s260] sm:$0x1] %v430
        %s432 = sand.u32 %s119, 1
        %s433 = scalar_lea.sflag [#allocation5], %s432
        %s434 = sand.u32 %s119, 1
        %s435 = smul.addr %s434, 32
        %s436 = scalar_lea.vmem [#allocation8], %s435
        %s437 = sand.u32 %s147, 1
        %s438 = scalar_lea.sflag [#allocation10], %s437
        %s439 = sand.u32 %s147, 1
        %s440 = scalar_lea.vmem [#allocation9], %s439
        // Predicated region
        $region41: #{tpu_custom_call.1} parent=31 // pred_check
          %p441 = pneg %p129
        $region42: #{tpu_custom_call.1} parent=31 // pred_check_branch
          %443 = sbr.rel (%p441) target = $region44
        $region43: #{tpu_custom_call.1} parent=31 // pred_region
          %s445 = ssub.s32 512, 512
          %446 = vsyncadd %s433, %s445
          %s447 = smul.addr %s31, 4
          %s448 = sadd.s32 %s32, %s447
          %s449 = smul.addr %s448, 128
          %s450 = scalar_lea.hbm %s3, %s449
          %s451 = sshll.u32 %s436, 4
          %s452 = int_to_ptr.vmem [resolvable:$true] %s451
          %457 = dma.vmem_to_hbm [thread:$0]  %s452, 512, %s450, %s433, 128, 128, 8
        $region44: #{tpu_custom_call.1} parent=31 // pred_fallthru
          _
        // Predicated region
        $region45: #{tpu_custom_call.1} parent=31 // pred_check
          %p458 = pneg %p157
        $region46: #{tpu_custom_call.1} parent=31 // pred_check_branch
          %460 = sbr.rel (%p458) target = $region48
        $region47: #{tpu_custom_call.1} parent=31 // pred_region
          %s462 = ssub.s32 16, 16
          %463 = vsyncadd %s438, %s462
          %s464 = sadd.s32 %s32, %s31
          %s465 = smul.addr %s464, 16
          %s466 = scalar_lea.hbm %s4, %s465
          %s468 = sshll.u32 %s440, 4
          %s469 = int_to_ptr.vmem [resolvable:$true] %s468
          %471 = dma.vmem_to_hbm [thread:$0]  %s469, 16, %s466, %s438
        $region48: #{tpu_custom_call.1} parent=31 // pred_fallthru
          _
      $region32: #{tpu_custom_call.1} parent=5 // pred_fallthru
        _
      %p472 = scmp.le.s32.totalorder 2, %s22
      // Predicated region
      $region49: #{tpu_custom_call.1} parent=5 // pred_check
        %p473 = pneg %p472
      $region50: #{tpu_custom_call.1} parent=5 // pred_check_branch
        %475 = sbr.rel (%p473) target = $region52
      $region51: #{tpu_custom_call.1} parent=5 // pred_region
        %s476 = ssub.s32 %s22, 2
        // Predicated region
        $region53: #{tpu_custom_call.1} parent=51 // pred_check
          %p477 = pneg %p135
        $region54: #{tpu_custom_call.1} parent=51 // pred_check_branch
          %479 = sbr.rel (%p477) target = $region56
        $region55: #{tpu_custom_call.1} parent=51 // pred_region
          %s480 = sand.u32 %s120, 1
          %s481 = scalar_lea.sflag [#allocation5], %s480
          %s482 = sand.u32 %s120, 1
          %s483 = smul.addr %s482, 32
          %s484 = scalar_lea.vmem [#allocation8], %s483
          %485 = dma.done %s481, 512
        $region56: #{tpu_custom_call.1} parent=51 // pred_fallthru
          _
        // Predicated region
        $region57: #{tpu_custom_call.1} parent=51 // pred_check
          %p486 = pneg %p163
        $region58: #{tpu_custom_call.1} parent=51 // pred_check_branch
          %488 = sbr.rel (%p486) target = $region60
        $region59: #{tpu_custom_call.1} parent=51 // pred_region
          %s489 = sand.u32 %s148, 1
          %s490 = scalar_lea.sflag [#allocation10], %s489
          %s491 = sand.u32 %s148, 1
          %s492 = scalar_lea.vmem [#allocation9], %s491
          %493 = dma.done %s490, 16
        $region60: #{tpu_custom_call.1} parent=51 // pred_fallthru
          _
      $region52: #{tpu_custom_call.1} parent=5 // pred_fallthru
        _
    $region6: #{tpu_custom_call.1} parent=1 // loop_footer
      %s26 = sadd.s32 1, %s22
    $region7: #{tpu_custom_call.1} parent=1 // loop_footer_branch
      %21 = sbr.rel target = $region3
    $region8: #{tpu_custom_call.1} parent=1 // loop_exit
      _
    %494 = vsyncpa [#allocation4], 1
    %s495 = scalar_lea.sflag [#allocation4], 1
    %496 = vsyncpa %s495, 1
    %497 = vsyncpa [#allocation7], 1
    %498 = vsyncpa [#allocation5], 1
    %s499 = scalar_lea.sflag [#allocation5], 1
    %500 = vsyncpa %s499, 1
    %501 = vsyncpa [#allocation10], 1
    %s502 = scalar_lea.sflag [#allocation10], 1
    %503 = vsyncpa %s502, 1

</llo_original>
